<compile_context>
chip_gen: v5e
topology: v5e:2x2
jax: 0.10.0
libtpu: 0.0.40
codegen_flags: <defaults>
</compile_context>

<pallas_src>
import functools

import jax
import jax.numpy as jnp
from jax import lax
from jax.experimental import pallas as pl
from jax.experimental.pallas import tpu as pltpu

# ---- static configuration (small shapes consistent with the module's usage) ----
BATCH = 2
SEQ = 8
HIDDEN = 32
EPS = 1e-12


# ----------------------------- kernel -----------------------------
def layer_norm_kernel(x_ref, p_ref, o_ref, *, inv_d, eps):
    x = x_ref[...].astype(jnp.float32)                       # (N, D) whole flattened batch
    # Two independent cross-lane reductions (no serial dependence between them).
    sum_x = jnp.sum(x, axis=-1, keepdims=True)                # (N, 1)
    sum_xx = jnp.sum(x * x, axis=-1, keepdims=True)           # (N, 1)
    u = sum_x * inv_d                                         # mean
    var = jnp.maximum(sum_xx * inv_d - u * u, 0.0)            # biased variance, TF style
    xn = (x - u) * lax.rsqrt(var + eps)                       # eps inside the sqrt (EUP)
    g = p_ref[0:1, :]                                         # (1, D) weight
    b = p_ref[1:2, :]                                         # (1, D) bias
    o_ref[...] = (g * xn + b).astype(o_ref.dtype)


# ----------------------------- wrapper -----------------------------
def layer_norm(x, weight, bias, eps=EPS):
    orig_shape = x.shape
    D = orig_shape[-1]
    x2 = x.reshape(-1, D)                                     # flatten leading dims: (B*S, D)
    N = x2.shape[0]
    # Merge weight/bias into a single (2, D) parameter slab -> one DMA.
    params = jnp.stack(
        [weight.reshape(D).astype(jnp.float32), bias.reshape(D).astype(jnp.float32)], axis=0
    )

    out = pl.pallas_call(
        functools.partial(layer_norm_kernel, inv_d=1.0 / D, eps=eps),
        out_shape=jax.ShapeDtypeStruct((N, D), x.dtype),
        in_specs=[
            pl.BlockSpec(memory_space=pltpu.MemorySpace.VMEM),   # whole activations
            pl.BlockSpec(memory_space=pltpu.MemorySpace.VMEM),   # merged (weight, bias)
        ],
        out_specs=pl.BlockSpec(memory_space=pltpu.MemorySpace.VMEM),
    )(x2, params)
    return out.reshape(orig_shape)


# ----------------------------- pure-JAX reference -----------------------------
def ref_layer_norm(x, weight, bias, eps=EPS):
    u = jnp.mean(x, axis=-1, keepdims=True)
    s = jnp.mean((x - u) ** 2, axis=-1, keepdims=True)
    return weight * (x - u) / jnp.sqrt(s + eps) + bias


# ----------------------------- main -----------------------------
if __name__ == "__main__":
    key = jax.random.PRNGKey(0)
    k_x, k_w, k_b = jax.random.split(key, 3)

    x = jax.random.normal(k_x, (BATCH, SEQ, HIDDEN), jnp.float32)
    # Module initializes weight=ones, bias=zeros; perturb them so the affine part is exercised.
    weight = jnp.ones((HIDDEN,), jnp.float32) + 0.1 * jax.random.normal(k_w, (HIDDEN,), jnp.float32)
    bias = 0.1 * jax.random.normal(k_b, (HIDDEN,), jnp.float32)

    out = layer_norm(x, weight, bias)
    out = jax.block_until_ready(out)

    ref = jax.block_until_ready(ref_layer_norm(x, weight, bias))
    assert out.shape == (BATCH, SEQ, HIDDEN)
    assert jnp.allclose(out, ref, atol=1e-5, rtol=1e-5), float(jnp.max(jnp.abs(out - ref)))

    print("KERNEL_OK")
</pallas_src>

<mosaic_0001>
module attributes {stable_mosaic.version = 11 : i64} {
  func.func @layer_norm_kernel(%arg0: memref<16x32xf32, #tpu.memory_space<vmem>>, %arg1: memref<2x32xf32, #tpu.memory_space<vmem>>, %arg2: memref<16x32xf32, #tpu.memory_space<vmem>>) attributes {dimension_semantics = [], scalar_prefetch = 0 : i64, scratch_operands = 0 : i64, tpu.core_type = #tpu.core_type<tc>} {
    %c0 = arith.constant 0 : index
    %c0_0 = arith.constant 0 : index
    %0 = vector.load %arg0[%c0, %c0_0] : memref<16x32xf32, #tpu.memory_space<vmem>>, vector<16x32xf32>
    %cst = arith.constant dense<0.000000e+00> : vector<16xf32>
    %1 = vector.multi_reduction <add>, %0, %cst [1] : vector<16x32xf32> to vector<16xf32>
    %2 = vector.shape_cast %1 : vector<16xf32> to vector<16x1xf32>
    %3 = arith.mulf %0, %0 : vector<16x32xf32>
    %cst_1 = arith.constant dense<0.000000e+00> : vector<16xf32>
    %4 = vector.multi_reduction <add>, %3, %cst_1 [1] : vector<16x32xf32> to vector<16xf32>
    %5 = vector.shape_cast %4 : vector<16xf32> to vector<16x1xf32>
    %cst_2 = arith.constant 3.125000e-02 : f32
    %6 = vector.broadcast %cst_2 : f32 to vector<16x1xf32>
    %7 = arith.mulf %2, %6 : vector<16x1xf32>
    %cst_3 = arith.constant 3.125000e-02 : f32
    %8 = vector.broadcast %cst_3 : f32 to vector<16x1xf32>
    %9 = arith.mulf %5, %8 : vector<16x1xf32>
    %10 = arith.mulf %7, %7 : vector<16x1xf32>
    %11 = arith.subf %9, %10 : vector<16x1xf32>
    %cst_4 = arith.constant 0.000000e+00 : f32
    %12 = vector.broadcast %cst_4 : f32 to vector<16x1xf32>
    %13 = arith.maximumf %11, %12 : vector<16x1xf32>
    %14 = vector.broadcast %7 : vector<16x1xf32> to vector<16x32xf32>
    %15 = arith.subf %0, %14 : vector<16x32xf32>
    %cst_5 = arith.constant 9.99999996E-13 : f32
    %16 = vector.broadcast %cst_5 : f32 to vector<16x1xf32>
    %17 = arith.addf %13, %16 : vector<16x1xf32>
    %18 = math.rsqrt %17 : vector<16x1xf32>
    %19 = vector.broadcast %18 : vector<16x1xf32> to vector<16x32xf32>
    %20 = arith.mulf %15, %19 : vector<16x32xf32>
    %c0_6 = arith.constant 0 : index
    %c0_7 = arith.constant 0 : index
    %21 = vector.load %arg1[%c0_6, %c0_7] : memref<2x32xf32, #tpu.memory_space<vmem>>, vector<1x32xf32>
    %c1 = arith.constant 1 : index
    %c0_8 = arith.constant 0 : index
    %22 = vector.load %arg1[%c1, %c0_8] : memref<2x32xf32, #tpu.memory_space<vmem>>, vector<1x32xf32>
    %23 = vector.broadcast %21 : vector<1x32xf32> to vector<16x32xf32>
    %24 = arith.mulf %23, %20 : vector<16x32xf32>
    %25 = vector.broadcast %22 : vector<1x32xf32> to vector<16x32xf32>
    %26 = arith.addf %24, %25 : vector<16x32xf32>
    %c0_9 = arith.constant 0 : index
    %c0_10 = arith.constant 0 : index
    %27 = vector.load %arg2[%c0_9, %c0_10] : memref<16x32xf32, #tpu.memory_space<vmem>>, vector<16x32xf32>
    tpu.vector_store %arg2[%c0_9, %c0_10], %26 {strides = array<i32>} : memref<16x32xf32, #tpu.memory_space<vmem>>, vector<16x32xf32>,
    return
  }
}

</mosaic_0001>

<llo_original>
// kernel: tpu_custom_call.1
$region0: #{tpu_custom_call.1}
  #allocation0 [shape = 'u32[]', space=smem, size = 0x4, offset = 0x4, fixed_abs, tag = 'smem constant byte address 0x4 - core index']
  #allocation1 [shape = 'u32[72,128]{1,0:T(1,128)}', space=vmem, size = 0x9000, scoped, tag = 'internal scratch']
  %s0 = inlined_call_operand.hbm [shape: f32[16,32], index: 0, kind: input, shape index: {}]
  %s1 = inlined_call_operand.hbm [shape: f32[2,32], index: 1, kind: input, shape index: {}]
  %s2 = inlined_call_operand.hbm [shape: f32[16,32], index: 2, kind: output, shape index: {}]
  %s3 = sld [smem:[#allocation0]]
  $region26: #{tpu_custom_call.1} parent=0
    _
  %s5 = ssub.s32 1, %s3
  %s6 = scalar_select 0, %s5, %s3
  $region1: #{tpu_custom_call.1} parent=0
    #allocation2 [shape = 'u8[8192]{0}', space=vmem, size = 0x2000, scoped, tag = 'input window, operand 0, single buffered']
    #allocation3 [shape = 's32[1]{0}', space=sflag, size = 0x4, scoped, tag = 'scoped memory for tpu_custom_call.1']
    #allocation4 [shape = 's32[1]{0}', space=sflag, size = 0x4, scoped, tag = 'scoped memory for tpu_custom_call.1']
    #allocation5 [shape = 'u8[1024]{0}', space=vmem, size = 0x400, scoped, tag = 'input window, operand 1, single buffered']
    #allocation6 [shape = 's32[1]{0}', space=sflag, size = 0x4, scoped, tag = 'scoped memory for tpu_custom_call.1']
    #allocation7 [shape = 'u8[8192]{0}', space=vmem, size = 0x2000, scoped, tag = 'output window, operand 0, single buffered']
    %7 = vsyncpa [#allocation3], 0
    %8 = vsyncpa [#allocation6], 0
    %9 = vsyncpa [#allocation4], 0
    // Predicated region
    $region2: #{tpu_custom_call.1} parent=1 // pred_check
      _
    $region3: #{tpu_custom_call.1} parent=1 // pred_check_branch
      %11 = sbr.rel (0) target = $region5
    $region4: #{tpu_custom_call.1} parent=1 // pred_region
      %13 = vsyncadd [#allocation3], 0
      %s14 = sshll.u32 %s0, 4
      %s15 = int_to_ptr.hbm [resolvable:$true] %s14
      %s16 = sshll.u32 [#allocation2], 4
      %s17 = int_to_ptr.vmem [resolvable:$true] %s16
      %22 = dma.hbm_to_vmem [thread:$0]  %s15, 256, %s17, [#allocation3], 128, 128, 8
    $region5: #{tpu_custom_call.1} parent=1 // pred_fallthru
      _
    // Predicated region
    $region6: #{tpu_custom_call.1} parent=1 // pred_check
      _
    $region7: #{tpu_custom_call.1} parent=1 // pred_check_branch
      %24 = sbr.rel (0) target = $region9
    $region8: #{tpu_custom_call.1} parent=1 // pred_region
      %26 = vsyncadd [#allocation6], 0
      %s28 = sshll.u32 %s1, 4
      %s29 = int_to_ptr.hbm [resolvable:$true] %s28
      %s30 = sshll.u32 [#allocation5], 4
      %s31 = int_to_ptr.vmem [resolvable:$true] %s30
      %33 = dma.hbm_to_vmem [thread:$0]  %s29, 32, %s31, [#allocation6]
    $region9: #{tpu_custom_call.1} parent=1 // pred_fallthru
      _
    // Predicated region
    $region10: #{tpu_custom_call.1} parent=1 // pred_check
      _
    $region11: #{tpu_custom_call.1} parent=1 // pred_check_branch
      %35 = sbr.rel (0) target = $region13
    $region12: #{tpu_custom_call.1} parent=1 // pred_region
      %37 = dma.done [#allocation3], 256
    $region13: #{tpu_custom_call.1} parent=1 // pred_fallthru
      _
    // Predicated region
    $region14: #{tpu_custom_call.1} parent=1 // pred_check
      _
    $region15: #{tpu_custom_call.1} parent=1 // pred_check_branch
      %39 = sbr.rel (0) target = $region17
    $region16: #{tpu_custom_call.1} parent=1 // pred_region
      %41 = dma.done [#allocation6], 32
    $region17: #{tpu_custom_call.1} parent=1 // pred_fallthru
      _
    %v42 = vld [vmem:[#allocation2] sm:$0xff]
    %v43 = vld [vmem:[#allocation2 + $0x8] sm:$0xff]
    %vm44 = vcmask 261120
    %v45 = vsel %vm44, %v42, 0.0
    %46 = vadd.xlane.f32.xlu0 %v45
    %v47 = vpop.xlane.xlu0 %46
    %v48 = vsel %vm44, %v43, 0.0
    %49 = vadd.xlane.f32.xlu0 %v48
    %v50 = vpop.xlane.xlu0 %49
    %v51 = vmul.f32 %v42, %v42
    %v52 = vmul.f32 %v43, %v43
    %v53 = vsel %vm44, %v51, 0.0
    %54 = vadd.xlane.f32.xlu0 %v53
    %v55 = vpop.xlane.xlu0 %54
    %v56 = vsel %vm44, %v52, 0.0
    %57 = vadd.xlane.f32.xlu0 %v56
    %v58 = vpop.xlane.xlu0 %57
    %v59 = vmul.f32 %v47, 0.03125
    %v60 = vmul.f32 %v50, 0.03125
    %v61 = vmul.f32 %v55, 0.03125
    %v62 = vmul.f32 %v58, 0.03125
    %v63 = vmul.f32 %v59, %v59
    %v64 = vmul.f32 %v60, %v60
    %v65 = vsub.f32 %v61, %v63
    %v66 = vsub.f32 %v62, %v64
    %v67 = vmax.f32 %v65, 0.0
    %v68 = vmax.f32 %v66, 0.0
    %v69 = vsub.f32 %v42, %v59
    %v70 = vsub.f32 %v43, %v60
    %v71 = vadd.f32 %v67, 1e-12
    %v72 = vadd.f32 %v68, 1e-12
    %v73 = vrsqrt.pop %v71
    %v74 = vmul.f32 %v73, %v71
    %v75 = vmul.f32 %v74, %v73
    %v76 = vmul.f32 0.5, %v75
    %v77 = vsub.f32 1.5, %v76
    %v78 = vmul.f32 %v73, %v77
    %vm79 = vweird.f32 %v71
    %vm80 = vweird.f32 %v73
    %vm81 = vmor %vm79, %vm80
    %v82 = vsel %vm81, %v73, %v78
    %v83 = vrsqrt.pop %v72
    %v84 = vmul.f32 %v83, %v72
    %v85 = vmul.f32 %v84, %v83
    %v86 = vmul.f32 0.5, %v85
    %v87 = vsub.f32 1.5, %v86
    %v88 = vmul.f32 %v83, %v87
    %vm89 = vweird.f32 %v72
    %vm90 = vweird.f32 %v83
    %vm91 = vmor %vm89, %vm90
    %v92 = vsel %vm91, %v83, %v88
    %v93 = vmul.f32 %v69, %v82
    %v94 = vmul.f32 %v70, %v92
    %v95 = vld [vmem:[#allocation5] sm:$0x1]
    %v96 = vld [vmem:[#allocation5 + $0x1] sm:$0x1]
    %v97 = vperm.slane %v95, 0
    %v98 = vmul.f32 %v97, %v93
    %v99 = vmul.f32 %v97, %v94
    %v100 = vperm.slane %v96, 0
    %v101 = vadd.f32 %v98, %v100
    %v102 = vadd.f32 %v99, %v100
    %103 = vst.msk [vmem:[#allocation7] sm:$0xff] %vm44, %v101
    %104 = vst.msk [vmem:[#allocation7 + $0x8] sm:$0xff] %vm44, %v102
    // Predicated region
    $region18: #{tpu_custom_call.1} parent=1 // pred_check
      _
    $region19: #{tpu_custom_call.1} parent=1 // pred_check_branch
      %106 = sbr.rel (0) target = $region21
    $region20: #{tpu_custom_call.1} parent=1 // pred_region
      %108 = vsyncadd [#allocation4], 0
      %s109 = sshll.u32 [#allocation7], 4
      %s110 = int_to_ptr.vmem [resolvable:$true] %s109
      %s111 = sshll.u32 %s2, 4
      %s112 = int_to_ptr.hbm [resolvable:$true] %s111
      %117 = dma.vmem_to_hbm [thread:$0]  %s110, 256, %s112, [#allocation4], 128, 128, 8
    $region21: #{tpu_custom_call.1} parent=1 // pred_fallthru
      _
    // Predicated region
    $region22: #{tpu_custom_call.1} parent=1 // pred_check
      _
    $region23: #{tpu_custom_call.1} parent=1 // pred_check_branch
      %119 = sbr.rel (0) target = $region25
    $region24: #{tpu_custom_call.1} parent=1 // pred_region
      %121 = dma.done [#allocation4], 256
    $region25: #{tpu_custom_call.1} parent=1 // pred_fallthru
      _
    %122 = vsyncpa [#allocation3], 1
    %123 = vsyncpa [#allocation6], 1
    %124 = vsyncpa [#allocation4], 1

</llo_original>
